<compile_context>
chip_gen: v6e
topology: v6e:2x2x1
jax: 0.10.0
libtpu: 0.0.40
codegen_flags: <defaults>
</compile_context>

<pallas_src>
import functools
import math

import jax
import jax.numpy as jnp
from jax.experimental import pallas as pl
from jax.experimental.pallas import tpu as pltpu


def _round_up(n, m):
    return ((n + m - 1) // m) * m


def _lane_multiple():
    # v6e / v7x MXU is 2x256x256 -> prefer 256-multiples for wide layers.
    # v5e (and older) MXU tiles are 128-wide -> 128-multiples already optimal.
    try:
        kind = jax.devices()[0].device_kind.lower()
    except Exception:
        return 128
    if any(t in kind for t in ("v2", "v3", "v4", "v5")):
        return 128
    return 256


def _pad_lane(d, lane_mult):
    if d <= 128:
        return 128
    return _round_up(d, lane_mult)


def _mlp_fused_kernel(x_ref, *refs, n_layers, out_widths, vpu_last):
    """Fused MLP on one batch tile; activations stay in vregs between layers.

    refs = (w_0, ..., w_{L-1}, bias_all, o_ref)
      hidden w_l : bf16 (K_l_p, F_{l+1}_p)  -> MXU matmul, f32 accumulation
      last   w   : f32  (1, K_p) if vpu_last (tiny out_f) -> VPU mul + lane reduce
                   bf16 (K_p, out_f) otherwise
      bias_all   : f32 (n_layers, F_max), row l = layer-l bias (zero padded)
    ReLU after every layer except the last; sigmoid on the last (matches PyTorch).
    Zero-padded weight rows/cols + zero bias keep padded lanes exactly 0 after ReLU.
    """
    w_refs = refs[:n_layers]
    b_ref = refs[n_layers]
    o_ref = refs[-1]

    h = x_ref[...].astype(jnp.float32)
    for l in range(n_layers):
        fp = out_widths[l]
        b = b_ref[l, :fp]                                        # f32 (fp,)
        if l < n_layers - 1:
            acc = jnp.dot(h.astype(jnp.bfloat16), w_refs[l][...],
                          preferred_element_type=jnp.float32)
            h = jnp.maximum(acc + b, 0.0)                        # padded lanes stay 0
        elif vpu_last:
            # Tiny output width: VPU multiply + cross-lane reduce instead of a
            # (Kp, 128) matmul that would waste 127/128 of the MXU columns.
            acc = jnp.sum(h * w_refs[l][...], axis=-1, keepdims=True)
            h = jax.nn.sigmoid(acc + b)
        else:
            acc = jnp.dot(h.astype(jnp.bfloat16), w_refs[l][...],
                          preferred_element_type=jnp.float32)
            h = jax.nn.sigmoid(acc + b)
    o_ref[...] = h.astype(o_ref.dtype)


def init_params(layers, key):
    """Matches the PyTorch module: kaiming_uniform_(weight, nonlinearity='relu')
    and default nn.Linear bias init. Weights stored (in, out) == W_torch.T."""
    params = []
    for in_f, out_f in zip(layers, layers[1:]):
        key, kw, kb = jax.random.split(key, 3)
        w_bound = math.sqrt(2.0) * math.sqrt(3.0 / in_f)   # kaiming_uniform, relu gain
        b_bound = 1.0 / math.sqrt(in_f)                    # default bias init
        w = jax.random.uniform(kw, (in_f, out_f), jnp.float32, -w_bound, w_bound)
        b = jax.random.uniform(kb, (1, out_f), jnp.float32, -b_bound, b_bound)
        params.append((w, b))
    return params


def net_catalyst_forward(x, params, *, tile_b=512):
    """Runs the whole MLP as a single fused pallas_call over batch tiles."""
    B, in_f = x.shape
    n_layers = len(params)
    out_f = params[-1][0].shape[1]
    vpu_last = (out_f == 1)
    lane_mult = _lane_multiple()

    # ---- padded layer widths ------------------------------------------------
    true_out = [w.shape[1] for w, _ in params]
    p_in = [_round_up(in_f, 16)]          # layer-0 K: sublane-pad only (bf16 -> 16)
    p_out = []
    for l in range(n_layers):
        po = _pad_lane(true_out[l], lane_mult) if l < n_layers - 1 else out_f
        p_out.append(po)
        if l + 1 < n_layers:
            p_in.append(po)
    f_max = max(p_out + p_in)

    # ---- batch tiling (multiples of 16 for bf16 sublane packing) ------------
    if B > 8:
        # at least 2 tiles so a 2-TC chip (v7x) can split the "parallel" axis
        tb = min(tile_b, _round_up((B + 1) // 2, 16))
    else:
        tb = _round_up(max(B, 1), 16)
    # keep live activations + double-buffered x/out tiles comfortably in VMEM
    act_cap = 24 * 1024 * 1024
    tb = min(tb, max(16, (act_cap // (f_max * 4 * 6)) // 16 * 16))
    b_pad = _round_up(B, tb)
    grid = (b_pad // tb,)

    # ---- zero-padded operands (zeros are exact: no numerical leakage) -------
    x_p = jnp.zeros((b_pad, p_in[0]), jnp.float32).at[:B, :in_f].set(x)

    padded_ws = []
    for l, (w, _) in enumerate(params):
        ki, ko = w.shape
        if l == n_layers - 1 and vpu_last:
            w_p = jnp.zeros((1, p_in[l]), jnp.float32).at[0, :ki].set(w[:, 0])
        else:
            w_p = (jnp.zeros((p_in[l], p_out[l]), jnp.float32)
                   .at[:ki, :ko].set(w).astype(jnp.bfloat16))
        padded_ws.append(w_p)

    bias_all = jnp.zeros((n_layers, f_max), jnp.float32)
    for l, (_, b) in enumerate(params):
        bias_all = bias_all.at[l, :b.shape[1]].set(b[0])

    # ---- VMEM budget (weights single-buffered + tiles + activation slack) ---
    weight_bytes = sum(int(w.size) * w.dtype.itemsize for w in padded_ws)
    bias_bytes = int(bias_all.size) * bias_all.dtype.itemsize
    est = (weight_bytes + 2 * bias_bytes
           + 2 * tb * p_in[0] * 4 + 2 * tb * out_f * 4
           + 4 * tb * f_max * 4)
    vmem_limit = int(min(48 << 20, max(16 << 20, 2 * est + (4 << 20))))

    kernel = functools.partial(_mlp_fused_kernel, n_layers=n_layers,
                               out_widths=tuple(p_out), vpu_last=vpu_last)

    def run(single_buffer_weights):
        def invariant(shape):
            idx = lambda i: (0,) * len(shape)
            if single_buffer_weights:
                # grid-invariant inputs: double-buffering is pure VMEM waste
                return pl.BlockSpec(shape, idx, pipeline_mode=pl.Buffered(1))
            return pl.BlockSpec(shape, idx)

        in_specs = [pl.BlockSpec((tb, p_in[0]), lambda i: (i, 0))]
        in_specs += [invariant(w.shape) for w in padded_ws]
        in_specs.append(invariant(bias_all.shape))

        return pl.pallas_call(
            kernel,
            out_shape=jax.ShapeDtypeStruct((b_pad, out_f), x.dtype),
            grid=grid,
            in_specs=in_specs,
            out_specs=pl.BlockSpec((tb, out_f), lambda i: (i, 0)),
            compiler_params=pltpu.CompilerParams(
                dimension_semantics=("parallel",),
                vmem_limit_bytes=vmem_limit),
        )(x_p, *padded_ws, bias_all)

    try:
        out_padded = run(True)
    except Exception:
        # Older JAX without BlockSpec(pipeline_mode=...): identical math,
        # just default (double-buffered) weight specs.
        out_padded = run(False)

    return out_padded[:B]


if __name__ == "__main__":
    # Small shapes consistent with the module's forward (generic MLP).
    layers = [16, 32, 32, 1]
    batch = 8

    key = jax.random.PRNGKey(0)
    key, kx = jax.random.split(key)
    x = jax.random.normal(kx, (batch, layers[0]), jnp.float32)
    params = init_params(layers, key)

    out = net_catalyst_forward(x, params)
    jax.block_until_ready(out)

    # plain-JAX f32 reference (kernel uses bf16 matmuls -> loose tolerance)
    ref = x
    for l, (w, b) in enumerate(params):
        ref = ref @ w + b
        ref = jnp.maximum(ref, 0.0) if l < len(params) - 1 else jax.nn.sigmoid(ref)
    assert out.shape == (batch, layers[-1])
    assert jnp.allclose(out, ref, atol=3e-2, rtol=3e-2), \
        float(jnp.max(jnp.abs(out - ref)))

    print("KERNEL_OK")
</pallas_src>

<mosaic_0001>
module attributes {stable_mosaic.version = 11 : i64} {
  func.func @_mlp_fused_kernel(%arg0: i32, %arg1: memref<16x16xf32, #tpu.memory_space<vmem>>, %arg2: memref<16x128xbf16, #tpu.memory_space<vmem>>, %arg3: memref<128x128xbf16, #tpu.memory_space<vmem>>, %arg4: memref<1x128xf32, #tpu.memory_space<vmem>>, %arg5: memref<3x128xf32, #tpu.memory_space<vmem>>, %arg6: memref<16x1xf32, #tpu.memory_space<vmem>>) attributes {dimension_semantics = [#tpu.dimension_semantics<parallel>], iteration_bounds = array<i64: 1>, scalar_prefetch = 0 : i64, scratch_operands = 0 : i64, tpu.core_type = #tpu.core_type<tc>, window_params = [{transform_indices = @transform_0, window_bounds = array<i64: 16, 16>}, {pipeline_mode = #tpu.pipeline_mode<synchronous>, transform_indices = @transform_1, window_bounds = array<i64: 16, 128>}, {pipeline_mode = #tpu.pipeline_mode<synchronous>, transform_indices = @transform_2, window_bounds = array<i64: 128, 128>}, {pipeline_mode = #tpu.pipeline_mode<synchronous>, transform_indices = @transform_3, window_bounds = array<i64: 1, 128>}, {pipeline_mode = #tpu.pipeline_mode<synchronous>, transform_indices = @transform_4, window_bounds = array<i64: 3, 128>}, {transform_indices = @transform_5, window_bounds = array<i64: 16, 1>}]} {
    %c0 = arith.constant 0 : index
    %c0_0 = arith.constant 0 : index
    %0 = vector.load %arg1[%c0, %c0_0] : memref<16x16xf32, #tpu.memory_space<vmem>>, vector<16x16xf32>
    %c0_1 = arith.constant 0 : index
    %c0_2 = arith.constant 0 : index
    %1 = vector.load %arg5[%c0_1, %c0_2] : memref<3x128xf32, #tpu.memory_space<vmem>>, vector<1x128xf32>
    %2 = vector.shape_cast %1 : vector<1x128xf32> to vector<128xf32>
    %3 = arith.truncf %0 : vector<16x16xf32> to vector<16x16xbf16>
    %c0_3 = arith.constant 0 : index
    %c0_4 = arith.constant 0 : index
    %4 = vector.load %arg2[%c0_3, %c0_4] : memref<16x128xbf16, #tpu.memory_space<vmem>>, vector<16x128xbf16>
    %cst = arith.constant dense<0.000000e+00> : vector<16x128xf32>
    %5 = tpu.matmul %3, %4, %cst {dimension_numbers = #tpu.dot_dimension_numbers<[1], [0], [0], [1], [0, 0, 1, 1], [], []>} : vector<16x16xbf16>, vector<16x128xbf16>, vector<16x128xf32> -> vector<16x128xf32>
    %6 = vector.shape_cast %2 : vector<128xf32> to vector<1x128xf32>
    %7 = vector.broadcast %6 : vector<1x128xf32> to vector<16x128xf32>
    %8 = arith.addf %5, %7 : vector<16x128xf32>
    %cst_5 = arith.constant 0.000000e+00 : f32
    %9 = vector.broadcast %cst_5 : f32 to vector<16x128xf32>
    %10 = arith.maximumf %8, %9 : vector<16x128xf32>
    %c1 = arith.constant 1 : index
    %c0_6 = arith.constant 0 : index
    %11 = vector.load %arg5[%c1, %c0_6] : memref<3x128xf32, #tpu.memory_space<vmem>>, vector<1x128xf32>
    %12 = vector.shape_cast %11 : vector<1x128xf32> to vector<128xf32>
    %13 = arith.truncf %10 : vector<16x128xf32> to vector<16x128xbf16>
    %c0_7 = arith.constant 0 : index
    %c0_8 = arith.constant 0 : index
    %14 = vector.load %arg3[%c0_7, %c0_8] : memref<128x128xbf16, #tpu.memory_space<vmem>>, vector<128x128xbf16>
    %cst_9 = arith.constant dense<0.000000e+00> : vector<16x128xf32>
    %15 = tpu.matmul %13, %14, %cst_9 {dimension_numbers = #tpu.dot_dimension_numbers<[1], [0], [0], [1], [0, 0, 1, 1], [], []>} : vector<16x128xbf16>, vector<128x128xbf16>, vector<16x128xf32> -> vector<16x128xf32>
    %16 = vector.shape_cast %12 : vector<128xf32> to vector<1x128xf32>
    %17 = vector.broadcast %16 : vector<1x128xf32> to vector<16x128xf32>
    %18 = arith.addf %15, %17 : vector<16x128xf32>
    %cst_10 = arith.constant 0.000000e+00 : f32
    %19 = vector.broadcast %cst_10 : f32 to vector<16x128xf32>
    %20 = arith.maximumf %18, %19 : vector<16x128xf32>
    %c2 = arith.constant 2 : index
    %c0_11 = arith.constant 0 : index
    %21 = vector.load %arg5[%c2, %c0_11] : memref<3x128xf32, #tpu.memory_space<vmem>>, vector<1x1xf32>
    %22 = vector.shape_cast %21 : vector<1x1xf32> to vector<1xf32>
    %c0_12 = arith.constant 0 : index
    %c0_13 = arith.constant 0 : index
    %23 = vector.load %arg4[%c0_12, %c0_13] : memref<1x128xf32, #tpu.memory_space<vmem>>, vector<1x128xf32>
    %24 = vector.broadcast %23 : vector<1x128xf32> to vector<16x128xf32>
    %25 = arith.mulf %20, %24 : vector<16x128xf32>
    %cst_14 = arith.constant dense<0.000000e+00> : vector<16xf32>
    %26 = vector.multi_reduction <add>, %25, %cst_14 [1] : vector<16x128xf32> to vector<16xf32>
    %27 = vector.shape_cast %26 : vector<16xf32> to vector<16x1xf32>
    %28 = vector.shape_cast %22 : vector<1xf32> to vector<1x1xf32>
    %29 = vector.broadcast %28 : vector<1x1xf32> to vector<16x1xf32>
    %30 = arith.addf %27, %29 : vector<16x1xf32>
    %31 = arith.negf %30 : vector<16x1xf32>
    %32 = math.exp %31 : vector<16x1xf32>
    %cst_15 = arith.constant 1.000000e+00 : f32
    %33 = vector.broadcast %cst_15 : f32 to vector<16x1xf32>
    %34 = arith.addf %33, %32 : vector<16x1xf32>
    %35 = arith.divf %33, %34 : vector<16x1xf32>
    %c0_16 = arith.constant 0 : index
    %c0_17 = arith.constant 0 : index
    %36 = vector.load %arg6[%c0_16, %c0_17] : memref<16x1xf32, #tpu.memory_space<vmem>>, vector<16x1xf32>
    tpu.vector_store %arg6[%c0_16, %c0_17], %35 {strides = array<i32>} : memref<16x1xf32, #tpu.memory_space<vmem>>, vector<16x1xf32>,
    return
  }
  func.func @transform_0(%arg0: i32) -> (i32, i32) {
    %c0_i32 = arith.constant 0 : i32
    %c0_i32_0 = arith.constant 0 : i32
    return %arg0, %c0_i32 : i32, i32
  }
  func.func @transform_1(%arg0: i32) -> (i32, i32) {
    %c0_i32 = arith.constant 0 : i32
    %c0_i32_0 = arith.constant 0 : i32
    %c0_i32_1 = arith.constant 0 : i32
    return %c0_i32, %c0_i32_0 : i32, i32
  }
  func.func @transform_2(%arg0: i32) -> (i32, i32) {
    %c0_i32 = arith.constant 0 : i32
    %c0_i32_0 = arith.constant 0 : i32
    %c0_i32_1 = arith.constant 0 : i32
    return %c0_i32, %c0_i32_0 : i32, i32
  }
  func.func @transform_3(%arg0: i32) -> (i32, i32) {
    %c0_i32 = arith.constant 0 : i32
    %c0_i32_0 = arith.constant 0 : i32
    %c0_i32_1 = arith.constant 0 : i32
    return %c0_i32, %c0_i32_0 : i32, i32
  }
  func.func @transform_4(%arg0: i32) -> (i32, i32) {
    %c0_i32 = arith.constant 0 : i32
    %c0_i32_0 = arith.constant 0 : i32
    %c0_i32_1 = arith.constant 0 : i32
    return %c0_i32, %c0_i32_0 : i32, i32
  }
  func.func @transform_5(%arg0: i32) -> (i32, i32) {
    %c0_i32 = arith.constant 0 : i32
    %c0_i32_0 = arith.constant 0 : i32
    return %arg0, %c0_i32 : i32, i32
  }
}

module attributes {stable_mosaic.version = 11 : i64} {
  func.func @_mlp_fused_kernel(%arg0: i32, %arg1: memref<16x16xf32, #tpu.memory_space<vmem>>, %arg2: memref<16x128xbf16, #tpu.memory_space<vmem>>, %arg3: memref<128x128xbf16, #tpu.memory_space<vmem>>, %arg4: memref<1x128xf32, #tpu.memory_space<vmem>>, %arg5: memref<3x128xf32, #tpu.memory_space<vmem>>, %arg6: memref<16x1xf32, #tpu.memory_space<vmem>>) attributes {dimension_semantics = [#tpu.dimension_semantics<parallel>], iteration_bounds = array<i64: 1>, scalar_prefetch = 0 : i64, scratch_operands = 0 : i64, tpu.core_type = #tpu.core_type<tc>, window_params = [{transform_indices = @transform_0, window_bounds = array<i64: 16, 16>}, {pipeline_mode = #tpu.pipeline_mode<synchronous>, transform_indices = @transform_1, window_bounds = array<i64: 16, 128>}, {pipeline_mode = #tpu.pipeline_mode<synchronous>, transform_indices = @transform_2, window_bounds = array<i64: 128, 128>}, {pipeline_mode = #tpu.pipeline_mode<synchronous>, transform_indices = @transform_3, window_bounds = array<i64: 1, 128>}, {pipeline_mode = #tpu.pipeline_mode<synchronous>, transform_indices = @transform_4, window_bounds = array<i64: 3, 128>}, {transform_indices = @transform_5, window_bounds = array<i64: 16, 1>}]} {
    %c0 = arith.constant 0 : index
    %c0_0 = arith.constant 0 : index
    %0 = vector.load %arg1[%c0, %c0_0] : memref<16x16xf32, #tpu.memory_space<vmem>>, vector<16x16xf32>
    %c0_1 = arith.constant 0 : index
    %c0_2 = arith.constant 0 : index
    %1 = vector.load %arg5[%c0_1, %c0_2] : memref<3x128xf32, #tpu.memory_space<vmem>>, vector<1x128xf32>
    %2 = vector.shape_cast %1 : vector<1x128xf32> to vector<128xf32>
    %3 = arith.truncf %0 : vector<16x16xf32> to vector<16x16xbf16>
    %c0_3 = arith.constant 0 : index
    %c0_4 = arith.constant 0 : index
    %4 = vector.load %arg2[%c0_3, %c0_4] : memref<16x128xbf16, #tpu.memory_space<vmem>>, vector<16x128xbf16>
    %cst = arith.constant dense<0.000000e+00> : vector<16x128xf32>
    %5 = tpu.matmul %3, %4, %cst {dimension_numbers = #tpu.dot_dimension_numbers<[1], [0], [0], [1], [0, 0, 1, 1], [], []>} : vector<16x16xbf16>, vector<16x128xbf16>, vector<16x128xf32> -> vector<16x128xf32>
    %6 = vector.shape_cast %2 : vector<128xf32> to vector<1x128xf32>
    %7 = vector.broadcast %6 : vector<1x128xf32> to vector<16x128xf32>
    %8 = arith.addf %5, %7 : vector<16x128xf32>
    %cst_5 = arith.constant 0.000000e+00 : f32
    %9 = vector.broadcast %cst_5 : f32 to vector<16x128xf32>
    %10 = arith.maximumf %8, %9 : vector<16x128xf32>
    %c1 = arith.constant 1 : index
    %c0_6 = arith.constant 0 : index
    %11 = vector.load %arg5[%c1, %c0_6] : memref<3x128xf32, #tpu.memory_space<vmem>>, vector<1x128xf32>
    %12 = vector.shape_cast %11 : vector<1x128xf32> to vector<128xf32>
    %13 = arith.truncf %10 : vector<16x128xf32> to vector<16x128xbf16>
    %c0_7 = arith.constant 0 : index
    %c0_8 = arith.constant 0 : index
    %14 = vector.load %arg3[%c0_7, %c0_8] : memref<128x128xbf16, #tpu.memory_space<vmem>>, vector<128x128xbf16>
    %cst_9 = arith.constant dense<0.000000e+00> : vector<16x128xf32>
    %15 = tpu.matmul %13, %14, %cst_9 {dimension_numbers = #tpu.dot_dimension_numbers<[1], [0], [0], [1], [0, 0, 1, 1], [], []>} : vector<16x128xbf16>, vector<128x128xbf16>, vector<16x128xf32> -> vector<16x128xf32>
    %16 = vector.shape_cast %12 : vector<128xf32> to vector<1x128xf32>
    %17 = vector.broadcast %16 : vector<1x128xf32> to vector<16x128xf32>
    %18 = arith.addf %15, %17 : vector<16x128xf32>
    %cst_10 = arith.constant 0.000000e+00 : f32
    %19 = vector.broadcast %cst_10 : f32 to vector<16x128xf32>
    %20 = arith.maximumf %18, %19 : vector<16x128xf32>
    %c2 = arith.constant 2 : index
    %c0_11 = arith.constant 0 : index
    %21 = vector.load %arg5[%c2, %c0_11] : memref<3x128xf32, #tpu.memory_space<vmem>>, vector<1x1xf32>
    %22 = vector.shape_cast %21 : vector<1x1xf32> to vector<1xf32>
    %c0_12 = arith.constant 0 : index
    %c0_13 = arith.constant 0 : index
    %23 = vector.load %arg4[%c0_12, %c0_13] : memref<1x128xf32, #tpu.memory_space<vmem>>, vector<1x128xf32>
    %24 = vector.broadcast %23 : vector<1x128xf32> to vector<16x128xf32>
    %25 = arith.mulf %20, %24 : vector<16x128xf32>
    %cst_14 = arith.constant dense<0.000000e+00> : vector<16xf32>
    %26 = vector.multi_reduction <add>, %25, %cst_14 [1] : vector<16x128xf32> to vector<16xf32>
    %27 = vector.shape_cast %26 : vector<16xf32> to vector<16x1xf32>
    %28 = vector.shape_cast %22 : vector<1xf32> to vector<1x1xf32>
    %29 = vector.broadcast %28 : vector<1x1xf32> to vector<16x1xf32>
    %30 = arith.addf %27, %29 : vector<16x1xf32>
    %31 = arith.negf %30 : vector<16x1xf32>
    %32 = math.exp %31 : vector<16x1xf32>
    %cst_15 = arith.constant 1.000000e+00 : f32
    %33 = vector.broadcast %cst_15 : f32 to vector<16x1xf32>
    %34 = arith.addf %33, %32 : vector<16x1xf32>
    %35 = arith.divf %33, %34 : vector<16x1xf32>
    %c0_16 = arith.constant 0 : index
    %c0_17 = arith.constant 0 : index
    %36 = vector.load %arg6[%c0_16, %c0_17] : memref<16x1xf32, #tpu.memory_space<vmem>>, vector<16x1xf32>
    tpu.vector_store %arg6[%c0_16, %c0_17], %35 {strides = array<i32>} : memref<16x1xf32, #tpu.memory_space<vmem>>, vector<16x1xf32>,
    return
  }
  func.func @transform_0(%arg0: i32) -> (i32, i32) {
    %c0_i32 = arith.constant 0 : i32
    %c0_i32_0 = arith.constant 0 : i32
    return %arg0, %c0_i32 : i32, i32
  }
  func.func @transform_1(%arg0: i32) -> (i32, i32) {
    %c0_i32 = arith.constant 0 : i32
    %c0_i32_0 = arith.constant 0 : i32
    %c0_i32_1 = arith.constant 0 : i32
    return %c0_i32, %c0_i32_0 : i32, i32
  }
  func.func @transform_2(%arg0: i32) -> (i32, i32) {
    %c0_i32 = arith.constant 0 : i32
    %c0_i32_0 = arith.constant 0 : i32
    %c0_i32_1 = arith.constant 0 : i32
    return %c0_i32, %c0_i32_0 : i32, i32
  }
  func.func @transform_3(%arg0: i32) -> (i32, i32) {
    %c0_i32 = arith.constant 0 : i32
    %c0_i32_0 = arith.constant 0 : i32
    %c0_i32_1 = arith.constant 0 : i32
    return %c0_i32, %c0_i32_0 : i32, i32
  }
  func.func @transform_4(%arg0: i32) -> (i32, i32) {
    %c0_i32 = arith.constant 0 : i32
    %c0_i32_0 = arith.constant 0 : i32
    %c0_i32_1 = arith.constant 0 : i32
    return %c0_i32, %c0_i32_0 : i32, i32
  }
  func.func @transform_5(%arg0: i32) -> (i32, i32) {
    %c0_i32 = arith.constant 0 : i32
    %c0_i32_0 = arith.constant 0 : i32
    return %arg0, %c0_i32 : i32, i32
  }
}

</mosaic_0001>

<llo_original>
// kernel: tpu_custom_call.1
$region0: #{tpu_custom_call.1}
  #allocation0 [shape = 'u32[]', space=smem, size = 0x4, offset = 0x4, fixed_abs, tag = 'smem constant byte address 0x4 - core index']
  #allocation1 [shape = 'u32[144,128]{1,0:T(1,128)}', space=vmem, size = 0x12000, scoped, tag = 'internal scratch']
  %s0 = inlined_call_operand.hbm [shape: f32[16,16], index: 0, kind: input, shape index: {}]
  %s1 = inlined_call_operand.hbm [shape: bf16[16,128], index: 1, kind: input, shape index: {}]
  %s2 = inlined_call_operand.hbm [shape: bf16[128,128], index: 2, kind: input, shape index: {}]
  %s3 = inlined_call_operand.vmem [shape: f32[1,128], index: 3, kind: input, shape index: {}]
  %s4 = inlined_call_operand.vmem [shape: f32[3,128], index: 4, kind: input, shape index: {}]
  %s5 = inlined_call_operand.vmem [shape: f32[16,1], index: 5, kind: output, shape index: {}]
  %s6 = sld [smem:[#allocation0]]
  $region42: #{tpu_custom_call.1} parent=0
    _
  %s8 = ssub.s32 1, %s6
  %s9 = scalar_select 0, %s8, %s6
  $region1: #{tpu_custom_call.1} parent=0
    #allocation2 [shape = 'u8[8192]{0}', space=vmem, size = 0x2000, scoped, tag = 'input window, operand 0, single buffered']
    #allocation3 [shape = 's32[1]{0}', space=sflag, size = 0x4, scoped, tag = 'scoped memory for tpu_custom_call.1']
    #allocation4 [shape = 'u8[4096]{0}', space=vmem, size = 0x1000, scoped, tag = 'input window, operand 1, single buffered']
    #allocation5 [shape = 's32[1]{0}', space=sflag, size = 0x4, scoped, tag = 'scoped memory for tpu_custom_call.1']
    #allocation6 [shape = 'u8[32768]{0}', space=vmem, size = 0x8000, scoped, tag = 'input window, operand 2, single buffered']
    %10 = vsyncpa [#allocation3], 0
    %11 = vsyncpa [#allocation5], 0
    // Predicated region
    $region2: #{tpu_custom_call.1} parent=1 // pred_check
      _
    $region3: #{tpu_custom_call.1} parent=1 // pred_check_branch
      %13 = sbr.rel (0) target = $region5
    $region4: #{tpu_custom_call.1} parent=1 // pred_region
      %s15 = ssub.s32 256, 256
      %16 = vsyncadd [#allocation3], %s15
      %s17 = sshll.u32 [#allocation2], 4
      %s18 = int_to_ptr.vmem [resolvable:$true] %s17
      %23 = dma.hbm_to_vmem [thread:$0]  %s0, 256, %s18, [#allocation3], 128, 128, 8
    $region5: #{tpu_custom_call.1} parent=1 // pred_fallthru
      _
    // Predicated region
    $region6: #{tpu_custom_call.1} parent=1 // pred_check
      _
    $region7: #{tpu_custom_call.1} parent=1 // pred_check_branch
      %25 = sbr.rel (0) target = $region9
    $region8: #{tpu_custom_call.1} parent=1 // pred_region
      %s27 = ssub.s32 128, 128
      %28 = vsyncadd [#allocation5], %s27
      %s29 = sshll.u32 [#allocation4], 4
      %s30 = int_to_ptr.vmem [resolvable:$true] %s29
      %35 = dma.hbm_to_vmem [thread:$0]  %s1, 128, %s30, [#allocation5], 64, 64, 4
    $region9: #{tpu_custom_call.1} parent=1 // pred_fallthru
      _
    // Predicated region
    $region10: #{tpu_custom_call.1} parent=1 // pred_check
      _
    $region11: #{tpu_custom_call.1} parent=1 // pred_check_branch
      %37 = sbr.rel (0) target = $region13
    $region12: #{tpu_custom_call.1} parent=1 // pred_region
      %s39 = ssub.s32 1024, 1024
      %40 = vsyncadd [#allocation5], %s39
      %s41 = sshll.u32 [#allocation6], 4
      %s42 = int_to_ptr.vmem [resolvable:$true] %s41
      %47 = dma.hbm_to_vmem [thread:$0]  %s2, 1024, %s42, [#allocation5], 64, 64, 4
    $region13: #{tpu_custom_call.1} parent=1 // pred_fallthru
      _
    // Predicated region
    $region14: #{tpu_custom_call.1} parent=1 // pred_check
      _
    $region15: #{tpu_custom_call.1} parent=1 // pred_check_branch
      %49 = sbr.rel (0) target = $region17
    $region16: #{tpu_custom_call.1} parent=1 // pred_region
      _
    $region17: #{tpu_custom_call.1} parent=1 // pred_fallthru
      _
    // Predicated region
    $region18: #{tpu_custom_call.1} parent=1 // pred_check
      _
    $region19: #{tpu_custom_call.1} parent=1 // pred_check_branch
      %51 = sbr.rel (0) target = $region21
    $region20: #{tpu_custom_call.1} parent=1 // pred_region
      _
    $region21: #{tpu_custom_call.1} parent=1 // pred_fallthru
      _
    // Predicated region
    $region22: #{tpu_custom_call.1} parent=1 // pred_check
      _
    $region23: #{tpu_custom_call.1} parent=1 // pred_check_branch
      %53 = sbr.rel (0) target = $region25
    $region24: #{tpu_custom_call.1} parent=1 // pred_region
      %54 = dma.done [#allocation3], 256
    $region25: #{tpu_custom_call.1} parent=1 // pred_fallthru
      _
    // Predicated region
    $region26: #{tpu_custom_call.1} parent=1 // pred_check
      _
    $region27: #{tpu_custom_call.1} parent=1 // pred_check_branch
      %56 = sbr.rel (0) target = $region29
    $region28: #{tpu_custom_call.1} parent=1 // pred_region
      %57 = dma.done [#allocation5], 128
    $region29: #{tpu_custom_call.1} parent=1 // pred_fallthru
      _
    // Predicated region
    $region30: #{tpu_custom_call.1} parent=1 // pred_check
      _
    $region31: #{tpu_custom_call.1} parent=1 // pred_check_branch
      %59 = sbr.rel (0) target = $region33
    $region32: #{tpu_custom_call.1} parent=1 // pred_region
      %60 = dma.done [#allocation5], 1024
    $region33: #{tpu_custom_call.1} parent=1 // pred_fallthru
      _
    %v62 = vld [vmem:[#allocation2] sm:$0xff]
    %v63 = vld [vmem:[#allocation2 + $0x8] sm:$0xff]
    %v64 = vld [vmem:[%s4] sm:$0x1]
    %v65 = vpack.c.bf16 %v63, %v62
    %v66 = vld [vmem:[#allocation4] sm:$0xf]
    %v67 = vld [vmem:[#allocation4 + $0x4] sm:$0xf]
    %v68 = vlaneseq
    %v69 = vshrl.u32 %v68, 7
    %v70 = vsub.s32 0, %v69
    %v71 = vrot.slane %v64, %v70
    %v74 = vunpack.c.l.b16 %v66
    %v75 = vunpack.c.l.b16 %v67
    %v76 = vpack.c.b16 %v75, %v74
    %vm78 = vcmask 130048
    %v80 = vsel %vm78, %v65, 0
    %82 = vmatprep.subr.bf16.mxu0 0
    %83 = vmatpush1.bf16.msra.mxu0 0
    %84 = vmatprep.subr.bf16.mxu0 0
    %85 = vmatpush1.bf16.msra.mxu0 0
    %86 = vmatprep.subr.bf16.mxu0 0
    %87 = vmatpush1.bf16.msra.mxu0 0
    %88 = vmatprep.subr.bf16.mxu0 0
    %89 = vmatpush1.bf16.msra.mxu0 0
    %90 = vmatprep.subr.bf16.mxu0 0
    %91 = vmatpush1.bf16.msra.mxu0 0
    %92 = vmatprep.subr.bf16.mxu0 0
    %93 = vmatpush1.bf16.msra.mxu0 0
    %94 = vmatprep.subr.bf16.mxu0 0
    %95 = vmatpush1.bf16.msra.mxu0 0
    %96 = vmatprep.subr.bf16.mxu0 0
    %97 = vmatpush1.bf16.msra.mxu0 %v76
    %98 = vmatprep.subr.bf16.mxu0 0
    %99 = vmatpush2.bf16.msra.mxu0 0
    %100 = vmatprep.subr.bf16.mxu0 0
    %101 = vmatpush2.bf16.msra.mxu0 0
    %102 = vmatprep.subr.bf16.mxu0 0
    %103 = vmatpush2.bf16.msra.mxu0 0
    %104 = vmatprep.subr.bf16.mxu0 0
    %105 = vmatpush2.bf16.msra.mxu0 0
    %106 = vmatprep.subr.bf16.mxu0 0
    %107 = vmatpush2.bf16.msra.mxu0 0
    %108 = vmatprep.subr.bf16.mxu0 0
    %109 = vmatpush2.bf16.msra.mxu0 0
    %110 = vmatprep.subr.bf16.mxu0 0
    %111 = vmatpush2.bf16.msra.mxu0 0
    %112 = vmatprep.subr.bf16.mxu0 0
    %113 = vmatpush2.bf16.msra.mxu0 0
    %114 = vmatprep.mubr.bf16.mxu0 0
    %115 = vmatmul.mubr.bf16.gmra.mxu0 %v80
    %v116 = vpop.f32.mrf.mxu0
    %v117 = vadd.f32 %v71, %v116
    %v118 = vpop.f32.mrf.mxu0
    %v119 = vpop.f32.mrf.mxu0
    %v120 = vadd.f32 %v71, %v119
    %v121 = vpop.f32.mrf.mxu0
    %122 = vdwg.mxu0
    %v123 = vmax.f32 %v117, 0.0
    %v124 = vmax.f32 %v120, 0.0
    %v125 = vld [vmem:[%s4 + $0x1] sm:$0x1]
    %v126 = vpack.c.bf16 %v124, %v123
    %v127 = vld [vmem:[#allocation6] sm:$0xf]
    %v128 = vld [vmem:[#allocation6 + $0x4] sm:$0xf]
    %v129 = vld [vmem:[#allocation6 + $0x8] sm:$0xf]
    %v130 = vld [vmem:[#allocation6 + $0xc] sm:$0xf]
    %v131 = vld [vmem:[#allocation6 + $0x10] sm:$0xf]
    %v132 = vld [vmem:[#allocation6 + $0x14] sm:$0xf]
    %v133 = vld [vmem:[#allocation6 + $0x18] sm:$0xf]
    %v134 = vld [vmem:[#allocation6 + $0x1c] sm:$0xf]
    %v135 = vld [vmem:[#allocation6 + $0x20] sm:$0xf]
    %v136 = vld [vmem:[#allocation6 + $0x24] sm:$0xf]
    %v137 = vld [vmem:[#allocation6 + $0x28] sm:$0xf]
    %v138 = vld [vmem:[#allocation6 + $0x2c] sm:$0xf]
    %v139 = vld [vmem:[#allocation6 + $0x30] sm:$0xf]
    %v140 = vld [vmem:[#allocation6 + $0x34] sm:$0xf]
    %v141 = vld [vmem:[#allocation6 + $0x38] sm:$0xf]
    %v142 = vld [vmem:[#allocation6 + $0x3c] sm:$0xf]
    %v143 = vlaneseq
    %v144 = vshrl.u32 %v143, 7
    %v145 = vsub.s32 0, %v144
    %v146 = vrot.slane %v125, %v145
    %v163 = vunpack.c.l.b16 %v127
    %v164 = vunpack.c.l.b16 %v128
    %v165 = vunpack.c.l.b16 %v129
    %v166 = vunpack.c.l.b16 %v130
    %v167 = vunpack.c.l.b16 %v131
    %v168 = vunpack.c.l.b16 %v132
    %v169 = vunpack.c.l.b16 %v133
    %v170 = vunpack.c.l.b16 %v134
    %v171 = vunpack.c.l.b16 %v135
    %v172 = vunpack.c.l.b16 %v136
    %v173 = vunpack.c.l.b16 %v137
    %v174 = vunpack.c.l.b16 %v138
    %v175 = vunpack.c.l.b16 %v139
    %v176 = vunpack.c.l.b16 %v140
    %v177 = vunpack.c.l.b16 %v141
    %v178 = vunpack.c.l.b16 %v142
    %v179 = vpack.c.b16 %v164, %v163
    %v180 = vpack.c.b16 %v166, %v165
    %v181 = vpack.c.b16 %v168, %v167
    %v182 = vpack.c.b16 %v170, %v169
    %v183 = vpack.c.b16 %v172, %v171
    %v184 = vpack.c.b16 %v174, %v173
    %v185 = vpack.c.b16 %v176, %v175
    %v186 = vpack.c.b16 %v178, %v177
    %195 = vmatprep.subr.bf16.mxu0 0
    %196 = vmatpush1.bf16.msra.mxu0 %v186
    %197 = vmatprep.subr.bf16.mxu0 0
    %198 = vmatpush1.bf16.msra.mxu0 %v185
    %199 = vmatprep.subr.bf16.mxu0 0
    %200 = vmatpush1.bf16.msra.mxu0 %v184
    %201 = vmatprep.subr.bf16.mxu0 0
    %202 = vmatpush1.bf16.msra.mxu0 %v183
    %203 = vmatprep.subr.bf16.mxu0 0
    %204 = vmatpush1.bf16.msra.mxu0 %v182
    %205 = vmatprep.subr.bf16.mxu0 0
    %206 = vmatpush1.bf16.msra.mxu0 %v181
    %207 = vmatprep.subr.bf16.mxu0 0
    %208 = vmatpush1.bf16.msra.mxu0 %v180
    %209 = vmatprep.subr.bf16.mxu0 0
    %210 = vmatpush1.bf16.msra.mxu0 %v179
    %211 = vmatprep.subr.bf16.mxu0 0
    %212 = vmatpush2.bf16.msra.mxu0 0
    %213 = vmatprep.subr.bf16.mxu0 0
    %214 = vmatpush2.bf16.msra.mxu0 0
    %215 = vmatprep.subr.bf16.mxu0 0
    %216 = vmatpush2.bf16.msra.mxu0 0
    %217 = vmatprep.subr.bf16.mxu0 0
    %218 = vmatpush2.bf16.msra.mxu0 0
    %219 = vmatprep.subr.bf16.mxu0 0
    %220 = vmatpush2.bf16.msra.mxu0 0
    %221 = vmatprep.subr.bf16.mxu0 0
    %222 = vmatpush2.bf16.msra.mxu0 0
    %223 = vmatprep.subr.bf16.mxu0 0
    %224 = vmatpush2.bf16.msra.mxu0 0
    %225 = vmatprep.subr.bf16.mxu0 0
    %226 = vmatpush2.bf16.msra.mxu0 0
    %227 = vmatprep.mubr.bf16.mxu0 0
    %228 = vmatmul.mubr.bf16.gmra.mxu0 %v126
    %v229 = vpop.f32.mrf.mxu0
    %v230 = vadd.f32 %v146, %v229
    %v231 = vpop.f32.mrf.mxu0
    %v232 = vpop.f32.mrf.mxu0
    %v233 = vadd.f32 %v146, %v232
    %v234 = vpop.f32.mrf.mxu0
    %235 = vdwg.mxu0
    %v236 = vmax.f32 %v230, 0.0
    %v237 = vmax.f32 %v233, 0.0
    %v238 = vld [vmem:[%s4 + $0x2] sm:$0x1]
    %v239 = vld [vmem:[%s3] sm:$0x1]
    %v241 = vlaneseq
    %v242 = vshrl.u32 %v241, 7
    %v243 = vsub.s32 0, %v242
    %v244 = vrot.slane %v239, %v243
    %v246 = vmul.f32 %v236, %v244
    %v247 = vmul.f32 %v237, %v244
    %248 = vadd.xlane.f32.xlu0 %v246
    %v249 = vpop.xlane.xlu0 %248
    %250 = vadd.xlane.f32.xlu0 %v247
    %v251 = vpop.xlane.xlu0 %250
    %v252 = vlaneseq
    %v253 = vshrl.u32 %v252, 7
    %v254 = vsub.s32 0, %v253
    %v255 = vrot.slane %v238, %v254
    %v256 = vadd.f32 %v249, %v255
    %v257 = vadd.f32 %v251, %v255
    %v258 = vxor.u32 %v256, 2147483648
    %v259 = vxor.u32 %v257, 2147483648
    %v260 = vmul.f32 %v258, 1.442695
    %v261 = vpow.pop %v260
    %v262 = vmul.f32 %v259, 1.442695
    %v263 = vpow.pop %v262
    %v264 = vadd.f32 %v261, 1.0
    %v265 = vadd.f32 %v263, 1.0
    %v266 = vrcp.pop %v264
    %v267 = vmul.f32 1.0, %v266
    %v268 = vrcp.pop %v265
    %v269 = vmul.f32 1.0, %v268
    %vm270 = vcmask 7168
    %271 = vst.msk [vmem:[%s5] sm:$0xff] %vm270, %v267
    %272 = vst.msk [vmem:[%s5 + $0x8] sm:$0xff] %vm270, %v269
    // Predicated region
    $region34: #{tpu_custom_call.1} parent=1 // pred_check
      _
    $region35: #{tpu_custom_call.1} parent=1 // pred_check_branch
      %274 = sbr.rel (0) target = $region37
    $region36: #{tpu_custom_call.1} parent=1 // pred_region
      _
    $region37: #{tpu_custom_call.1} parent=1 // pred_fallthru
      _
    // Predicated region
    $region38: #{tpu_custom_call.1} parent=1 // pred_check
      _
    $region39: #{tpu_custom_call.1} parent=1 // pred_check_branch
      %276 = sbr.rel (0) target = $region41
    $region40: #{tpu_custom_call.1} parent=1 // pred_region
      _
    $region41: #{tpu_custom_call.1} parent=1 // pred_fallthru
      _
    %277 = vsyncpa [#allocation3], 1
    %278 = vsyncpa [#allocation5], 1

// kernel: tpu_custom_call.1
$region0: #{tpu_custom_call.1}
  #allocation0 [shape = 'u32[]', space=smem, size = 0x4, offset = 0x4, fixed_abs, tag = 'smem constant byte address 0x4 - core index']
  #allocation1 [shape = 'u32[144,128]{1,0:T(1,128)}', space=vmem, size = 0x12000, scoped, tag = 'internal scratch']
  %s0 = inlined_call_operand.hbm [shape: f32[16,16], index: 0, kind: input, shape index: {}]
  %s1 = inlined_call_operand.hbm [shape: bf16[16,128], index: 1, kind: input, shape index: {}]
  %s2 = inlined_call_operand.hbm [shape: bf16[128,128], index: 2, kind: input, shape index: {}]
  %s3 = inlined_call_operand.vmem [shape: f32[1,128], index: 3, kind: input, shape index: {}]
  %s4 = inlined_call_operand.vmem [shape: f32[3,128], index: 4, kind: input, shape index: {}]
  %s5 = inlined_call_operand.vmem [shape: f32[16,1], index: 5, kind: output, shape index: {}]
  %s6 = sld [smem:[#allocation0]]
  $region42: #{tpu_custom_call.1} parent=0
    _
  %s8 = ssub.s32 1, %s6
  %s9 = scalar_select 0, %s8, %s6
  $region1: #{tpu_custom_call.1} parent=0
    #allocation2 [shape = 'u8[8192]{0}', space=vmem, size = 0x2000, scoped, tag = 'input window, operand 0, single buffered']
    #allocation3 [shape = 's32[1]{0}', space=sflag, size = 0x4, scoped, tag = 'scoped memory for tpu_custom_call.1']
    #allocation4 [shape = 'u8[4096]{0}', space=vmem, size = 0x1000, scoped, tag = 'input window, operand 1, single buffered']
    #allocation5 [shape = 's32[1]{0}', space=sflag, size = 0x4, scoped, tag = 'scoped memory for tpu_custom_call.1']
    #allocation6 [shape = 'u8[32768]{0}', space=vmem, size = 0x8000, scoped, tag = 'input window, operand 2, single buffered']
    %10 = vsyncpa [#allocation3], 0
    %11 = vsyncpa [#allocation5], 0
    // Predicated region
    $region2: #{tpu_custom_call.1} parent=1 // pred_check
      _
    $region3: #{tpu_custom_call.1} parent=1 // pred_check_branch
      %13 = sbr.rel (0) target = $region5
    $region4: #{tpu_custom_call.1} parent=1 // pred_region
      %s15 = ssub.s32 256, 256
      %16 = vsyncadd [#allocation3], %s15
      %s17 = sshll.u32 [#allocation2], 4
      %s18 = int_to_ptr.vmem [resolvable:$true] %s17
      %23 = dma.hbm_to_vmem [thread:$0]  %s0, 256, %s18, [#allocation3], 128, 128, 8
    $region5: #{tpu_custom_call.1} parent=1 // pred_fallthru
      _
    // Predicated region
    $region6: #{tpu_custom_call.1} parent=1 // pred_check
      _
    $region7: #{tpu_custom_call.1} parent=1 // pred_check_branch
      %25 = sbr.rel (0) target = $region9
    $region8: #{tpu_custom_call.1} parent=1 // pred_region
      %s27 = ssub.s32 128, 128
      %28 = vsyncadd [#allocation5], %s27
      %s29 = sshll.u32 [#allocation4], 4
      %s30 = int_to_ptr.vmem [resolvable:$true] %s29
      %35 = dma.hbm_to_vmem [thread:$0]  %s1, 128, %s30, [#allocation5], 64, 64, 4
    $region9: #{tpu_custom_call.1} parent=1 // pred_fallthru
      _
    // Predicated region
    $region10: #{tpu_custom_call.1} parent=1 // pred_check
      _
    $region11: #{tpu_custom_call.1} parent=1 // pred_check_branch
      %37 = sbr.rel (0) target = $region13
    $region12: #{tpu_custom_call.1} parent=1 // pred_region
      %s39 = ssub.s32 1024, 1024
      %40 = vsyncadd [#allocation5], %s39
      %s41 = sshll.u32 [#allocation6], 4
      %s42 = int_to_ptr.vmem [resolvable:$true] %s41
      %47 = dma.hbm_to_vmem [thread:$0]  %s2, 1024, %s42, [#allocation5], 64, 64, 4
    $region13: #{tpu_custom_call.1} parent=1 // pred_fallthru
      _
    // Predicated region
    $region14: #{tpu_custom_call.1} parent=1 // pred_check
      _
    $region15: #{tpu_custom_call.1} parent=1 // pred_check_branch
      %49 = sbr.rel (0) target = $region17
    $region16: #{tpu_custom_call.1} parent=1 // pred_region
      _
    $region17: #{tpu_custom_call.1} parent=1 // pred_fallthru
      _
    // Predicated region
    $region18: #{tpu_custom_call.1} parent=1 // pred_check
      _
    $region19: #{tpu_custom_call.1} parent=1 // pred_check_branch
      %51 = sbr.rel (0) target = $region21
    $region20: #{tpu_custom_call.1} parent=1 // pred_region
      _
    $region21: #{tpu_custom_call.1} parent=1 // pred_fallthru
      _
    // Predicated region
    $region22: #{tpu_custom_call.1} parent=1 // pred_check
      _
    $region23: #{tpu_custom_call.1} parent=1 // pred_check_branch
      %53 = sbr.rel (0) target = $region25
    $region24: #{tpu_custom_call.1} parent=1 // pred_region
      %54 = dma.done [#allocation3], 256
    $region25: #{tpu_custom_call.1} parent=1 // pred_fallthru
      _
    // Predicated region
    $region26: #{tpu_custom_call.1} parent=1 // pred_check
      _
    $region27: #{tpu_custom_call.1} parent=1 // pred_check_branch
      %56 = sbr.rel (0) target = $region29
    $region28: #{tpu_custom_call.1} parent=1 // pred_region
      %57 = dma.done [#allocation5], 128
    $region29: #{tpu_custom_call.1} parent=1 // pred_fallthru
      _
    // Predicated region
    $region30: #{tpu_custom_call.1} parent=1 // pred_check
      _
    $region31: #{tpu_custom_call.1} parent=1 // pred_check_branch
      %59 = sbr.rel (0) target = $region33
    $region32: #{tpu_custom_call.1} parent=1 // pred_region
      %60 = dma.done [#allocation5], 1024
    $region33: #{tpu_custom_call.1} parent=1 // pred_fallthru
      _
    %v62 = vld [vmem:[#allocation2] sm:$0xff]
    %v63 = vld [vmem:[#allocation2 + $0x8] sm:$0xff]
    %v64 = vld [vmem:[%s4] sm:$0x1]
    %v65 = vpack.c.bf16 %v63, %v62
    %v66 = vld [vmem:[#allocation4] sm:$0xf]
    %v67 = vld [vmem:[#allocation4 + $0x4] sm:$0xf]
    %v68 = vlaneseq
    %v69 = vshrl.u32 %v68, 7
    %v70 = vsub.s32 0, %v69
    %v71 = vrot.slane %v64, %v70
    %v74 = vunpack.c.l.b16 %v66
    %v75 = vunpack.c.l.b16 %v67
    %v76 = vpack.c.b16 %v75, %v74
    %vm78 = vcmask 130048
    %v80 = vsel %vm78, %v65, 0
    %82 = vmatprep.subr.bf16.mxu0 0
    %83 = vmatpush1.bf16.msra.mxu0 0
    %84 = vmatprep.subr.bf16.mxu0 0
    %85 = vmatpush1.bf16.msra.mxu0 0
    %86 = vmatprep.subr.bf16.mxu0 0
    %87 = vmatpush1.bf16.msra.mxu0 0
    %88 = vmatprep.subr.bf16.mxu0 0
    %89 = vmatpush1.bf16.msra.mxu0 0
    %90 = vmatprep.subr.bf16.mxu0 0
    %91 = vmatpush1.bf16.msra.mxu0 0
    %92 = vmatprep.subr.bf16.mxu0 0
    %93 = vmatpush1.bf16.msra.mxu0 0
    %94 = vmatprep.subr.bf16.mxu0 0
    %95 = vmatpush1.bf16.msra.mxu0 0
    %96 = vmatprep.subr.bf16.mxu0 0
    %97 = vmatpush1.bf16.msra.mxu0 %v76
    %98 = vmatprep.subr.bf16.mxu0 0
    %99 = vmatpush2.bf16.msra.mxu0 0
    %100 = vmatprep.subr.bf16.mxu0 0
    %101 = vmatpush2.bf16.msra.mxu0 0
    %102 = vmatprep.subr.bf16.mxu0 0
    %103 = vmatpush2.bf16.msra.mxu0 0
    %104 = vmatprep.subr.bf16.mxu0 0
    %105 = vmatpush2.bf16.msra.mxu0 0
    %106 = vmatprep.subr.bf16.mxu0 0
    %107 = vmatpush2.bf16.msra.mxu0 0
    %108 = vmatprep.subr.bf16.mxu0 0
    %109 = vmatpush2.bf16.msra.mxu0 0
    %110 = vmatprep.subr.bf16.mxu0 0
    %111 = vmatpush2.bf16.msra.mxu0 0
    %112 = vmatprep.subr.bf16.mxu0 0
    %113 = vmatpush2.bf16.msra.mxu0 0
    %114 = vmatprep.mubr.bf16.mxu0 0
    %115 = vmatmul.mubr.bf16.gmra.mxu0 %v80
    %v116 = vpop.f32.mrf.mxu0
    %v117 = vadd.f32 %v71, %v116
    %v118 = vpop.f32.mrf.mxu0
    %v119 = vpop.f32.mrf.mxu0
    %v120 = vadd.f32 %v71, %v119
    %v121 = vpop.f32.mrf.mxu0
    %122 = vdwg.mxu0
    %v123 = vmax.f32 %v117, 0.0
    %v124 = vmax.f32 %v120, 0.0
    %v125 = vld [vmem:[%s4 + $0x1] sm:$0x1]
    %v126 = vpack.c.bf16 %v124, %v123
    %v127 = vld [vmem:[#allocation6] sm:$0xf]
    %v128 = vld [vmem:[#allocation6 + $0x4] sm:$0xf]
    %v129 = vld [vmem:[#allocation6 + $0x8] sm:$0xf]
    %v130 = vld [vmem:[#allocation6 + $0xc] sm:$0xf]
    %v131 = vld [vmem:[#allocation6 + $0x10] sm:$0xf]
    %v132 = vld [vmem:[#allocation6 + $0x14] sm:$0xf]
    %v133 = vld [vmem:[#allocation6 + $0x18] sm:$0xf]
    %v134 = vld [vmem:[#allocation6 + $0x1c] sm:$0xf]
    %v135 = vld [vmem:[#allocation6 + $0x20] sm:$0xf]
    %v136 = vld [vmem:[#allocation6 + $0x24] sm:$0xf]
    %v137 = vld [vmem:[#allocation6 + $0x28] sm:$0xf]
    %v138 = vld [vmem:[#allocation6 + $0x2c] sm:$0xf]
    %v139 = vld [vmem:[#allocation6 + $0x30] sm:$0xf]
    %v140 = vld [vmem:[#allocation6 + $0x34] sm:$0xf]
    %v141 = vld [vmem:[#allocation6 + $0x38] sm:$0xf]
    %v142 = vld [vmem:[#allocation6 + $0x3c] sm:$0xf]
    %v143 = vlaneseq
    %v144 = vshrl.u32 %v143, 7
    %v145 = vsub.s32 0, %v144
    %v146 = vrot.slane %v125, %v145
    %v163 = vunpack.c.l.b16 %v127
    %v164 = vunpack.c.l.b16 %v128
    %v165 = vunpack.c.l.b16 %v129
    %v166 = vunpack.c.l.b16 %v130
    %v167 = vunpack.c.l.b16 %v131
    %v168 = vunpack.c.l.b16 %v132
    %v169 = vunpack.c.l.b16 %v133
    %v170 = vunpack.c.l.b16 %v134
    %v171 = vunpack.c.l.b16 %v135
    %v172 = vunpack.c.l.b16 %v136
    %v173 = vunpack.c.l.b16 %v137
    %v174 = vunpack.c.l.b16 %v138
    %v175 = vunpack.c.l.b16 %v139
    %v176 = vunpack.c.l.b16 %v140
    %v177 = vunpack.c.l.b16 %v141
    %v178 = vunpack.c.l.b16 %v142
    %v179 = vpack.c.b16 %v164, %v163
    %v180 = vpack.c.b16 %v166, %v165
    %v181 = vpack.c.b16 %v168, %v167
    %v182 = vpack.c.b16 %v170, %v169
    %v183 = vpack.c.b16 %v172, %v171
    %v184 = vpack.c.b16 %v174, %v173
    %v185 = vpack.c.b16 %v176, %v175
    %v186 = vpack.c.b16 %v178, %v177
    %195 = vmatprep.subr.bf16.mxu0 0
    %196 = vmatpush1.bf16.msra.mxu0 %v186
    %197 = vmatprep.subr.bf16.mxu0 0
    %198 = vmatpush1.bf16.msra.mxu0 %v185
    %199 = vmatprep.subr.bf16.mxu0 0
    %200 = vmatpush1.bf16.msra.mxu0 %v184
    %201 = vmatprep.subr.bf16.mxu0 0
    %202 = vmatpush1.bf16.msra.mxu0 %v183
    %203 = vmatprep.subr.bf16.mxu0 0
    %204 = vmatpush1.bf16.msra.mxu0 %v182
    %205 = vmatprep.subr.bf16.mxu0 0
    %206 = vmatpush1.bf16.msra.mxu0 %v181
    %207 = vmatprep.subr.bf16.mxu0 0
    %208 = vmatpush1.bf16.msra.mxu0 %v180
    %209 = vmatprep.subr.bf16.mxu0 0
    %210 = vmatpush1.bf16.msra.mxu0 %v179
    %211 = vmatprep.subr.bf16.mxu0 0
    %212 = vmatpush2.bf16.msra.mxu0 0
    %213 = vmatprep.subr.bf16.mxu0 0
    %214 = vmatpush2.bf16.msra.mxu0 0
    %215 = vmatprep.subr.bf16.mxu0 0
    %216 = vmatpush2.bf16.msra.mxu0 0
    %217 = vmatprep.subr.bf16.mxu0 0
    %218 = vmatpush2.bf16.msra.mxu0 0
    %219 = vmatprep.subr.bf16.mxu0 0
    %220 = vmatpush2.bf16.msra.mxu0 0
    %221 = vmatprep.subr.bf16.mxu0 0
    %222 = vmatpush2.bf16.msra.mxu0 0
    %223 = vmatprep.subr.bf16.mxu0 0
    %224 = vmatpush2.bf16.msra.mxu0 0
    %225 = vmatprep.subr.bf16.mxu0 0
    %226 = vmatpush2.bf16.msra.mxu0 0
    %227 = vmatprep.mubr.bf16.mxu0 0
    %228 = vmatmul.mubr.bf16.gmra.mxu0 %v126
    %v229 = vpop.f32.mrf.mxu0
    %v230 = vadd.f32 %v146, %v229
    %v231 = vpop.f32.mrf.mxu0
    %v232 = vpop.f32.mrf.mxu0
    %v233 = vadd.f32 %v146, %v232
    %v234 = vpop.f32.mrf.mxu0
    %235 = vdwg.mxu0
    %v236 = vmax.f32 %v230, 0.0
    %v237 = vmax.f32 %v233, 0.0
    %v238 = vld [vmem:[%s4 + $0x2] sm:$0x1]
    %v239 = vld [vmem:[%s3] sm:$0x1]
    %v241 = vlaneseq
    %v242 = vshrl.u32 %v241, 7
    %v243 = vsub.s32 0, %v242
    %v244 = vrot.slane %v239, %v243
    %v246 = vmul.f32 %v236, %v244
    %v247 = vmul.f32 %v237, %v244
    %248 = vadd.xlane.f32.xlu0 %v246
    %v249 = vpop.xlane.xlu0 %248
    %250 = vadd.xlane.f32.xlu0 %v247
    %v251 = vpop.xlane.xlu0 %250
    %v252 = vlaneseq
    %v253 = vshrl.u32 %v252, 7
    %v254 = vsub.s32 0, %v253
    %v255 = vrot.slane %v238, %v254
    %v256 = vadd.f32 %v249, %v255
    %v257 = vadd.f32 %v251, %v255
    %v258 = vxor.u32 %v256, 2147483648
    %v259 = vxor.u32 %v257, 2147483648
    %v260 = vmul.f32 %v258, 1.442695
    %v261 = vpow.pop %v260
    %v262 = vmul.f32 %v259, 1.442695
    %v263 = vpow.pop %v262
    %v264 = vadd.f32 %v261, 1.0
    %v265 = vadd.f32 %v263, 1.0
    %v266 = vrcp.pop %v264
    %v267 = vmul.f32 1.0, %v266
    %v268 = vrcp.pop %v265
    %v269 = vmul.f32 1.0, %v268
    %vm270 = vcmask 7168
    %271 = vst.msk [vmem:[%s5] sm:$0xff] %vm270, %v267
    %272 = vst.msk [vmem:[%s5 + $0x8] sm:$0xff] %vm270, %v269
    // Predicated region
    $region34: #{tpu_custom_call.1} parent=1 // pred_check
      _
    $region35: #{tpu_custom_call.1} parent=1 // pred_check_branch
      %274 = sbr.rel (0) target = $region37
    $region36: #{tpu_custom_call.1} parent=1 // pred_region
      _
    $region37: #{tpu_custom_call.1} parent=1 // pred_fallthru
      _
    // Predicated region
    $region38: #{tpu_custom_call.1} parent=1 // pred_check
      _
    $region39: #{tpu_custom_call.1} parent=1 // pred_check_branch
      %276 = sbr.rel (0) target = $region41
    $region40: #{tpu_custom_call.1} parent=1 // pred_region
      _
    $region41: #{tpu_custom_call.1} parent=1 // pred_fallthru
      _
    %277 = vsyncpa [#allocation3], 1
    %278 = vsyncpa [#allocation5], 1

</llo_original>
